<compile_context>
chip_gen: v7x
topology: tpu7x:2x2x1
jax: 0.10.0
libtpu: 0.0.40
codegen_flags: <defaults>
</compile_context>

<pallas_src>
import math
import functools

import jax
import jax.numpy as jnp
from jax import lax
from jax.experimental import pallas as pl
from jax.experimental.pallas import tpu as pltpu


# ---------------------------------------------------------------------------
# Sinusoidal table (same math as the PyTorch __init__)
# ---------------------------------------------------------------------------
def make_positional_encoding_table(d_model, max_len=5000, dtype=jnp.float32):
    position = jnp.arange(max_len, dtype=jnp.float32)[:, None]              # (L, 1)
    div_term = jnp.exp(
        jnp.arange(0, d_model, 2, dtype=jnp.float32) * (-math.log(10000.0) / d_model)
    )                                                                        # (D/2,)
    pe = jnp.zeros((max_len, d_model), dtype=jnp.float32)
    pe = pe.at[:, 0::2].set(jnp.sin(position * div_term))
    pe = pe.at[:, 1::2].set(jnp.cos(position * div_term))
    return pe.astype(dtype)


# ---------------------------------------------------------------------------
# Portable in-kernel RNG for dropout (no pltpu.prng_* -> works on TPU and in
# interpret mode).  Counter-based "lowbias32" hash on the element's global
# linear index; each grid step gets a disjoint counter range via program_id.
# ---------------------------------------------------------------------------
_GOLDEN = 0x9E3779B9


def _lowbias32(x):
    x = x ^ (x >> 16)
    x = x * jnp.uint32(0x7FEB352D)
    x = x ^ (x >> 15)
    x = x * jnp.uint32(0x846CA68B)
    x = x ^ (x >> 16)
    return x


def _dropout_in_block(y, seed_i32, p):
    """Inverted dropout on one VMEM block (pure VPU filler under the DMAs)."""
    shape = y.shape
    # Row-major linear index of each element within this block.
    idx = jnp.zeros(shape, dtype=jnp.uint32)
    stride = 1
    for d in range(len(shape) - 1, -1, -1):
        idx = idx + lax.broadcasted_iota(jnp.uint32, shape, d) * jnp.uint32(stride)
        stride *= shape[d]
    block_elems = stride
    # Unique stream per grid step: offset by the block's global position.
    offset = pl.program_id(0).astype(jnp.uint32) * jnp.uint32(block_elems & 0xFFFFFFFF)
    seed_u = seed_i32.astype(jnp.uint32) * jnp.uint32(_GOLDEN)
    bits = _lowbias32(_lowbias32(idx + offset) ^ seed_u)
    thresh = jnp.uint32(min(int(round(p * 4294967296.0)), 4294967295))
    keep = bits >= thresh                         # P(keep) = 1 - p
    scale = jnp.float32(1.0 / (1.0 - p))
    return jnp.where(keep, y, jnp.zeros_like(y)) * scale


# ---------------------------------------------------------------------------
# Kernels
# ---------------------------------------------------------------------------
def _add_pe_2d_kernel(x_ref, pe_ref, o_ref):
    # x, pe, o: (tile_s, B*D); pe already tiled across batch in the wrapper.
    o_ref[...] = x_ref[...] + pe_ref[...]


def _add_pe_3d_kernel(x_ref, pe_ref, o_ref):
    # x, o: (tile_s, B, D); pe: (tile_s, D) broadcast over batch in-kernel.
    o_ref[...] = x_ref[...] + pe_ref[...][:, None, :]


def _add_pe_dropout_2d_kernel(seed_ref, x_ref, pe_ref, o_ref, *, p):
    y = x_ref[...] + pe_ref[...]
    o_ref[...] = _dropout_in_block(y, seed_ref[0], p).astype(o_ref.dtype)


def _add_pe_dropout_3d_kernel(seed_ref, x_ref, pe_ref, o_ref, *, p):
    y = x_ref[...] + pe_ref[...][:, None, :]
    o_ref[...] = _dropout_in_block(y, seed_ref[0], p).astype(o_ref.dtype)


# ---------------------------------------------------------------------------
# Wrapper
# ---------------------------------------------------------------------------
# Per-operand block target: with double buffering of x + pe + out this keeps
# VMEM use ~12 MiB -> inside v5e's 16 MiB scoped default, ample headroom on
# v6e (32 MiB default / 128 MiB) and v7x (32 MiB / 64 MiB).
_TARGET_BLOCK_BYTES = 2 * 1024 * 1024


def _pick_tile_s(S, row_bytes):
    rows = max(1, _TARGET_BLOCK_BYTES // max(1, row_bytes))
    if rows >= S:
        return S                      # full extent -> block trivially legal
    return max(8, (rows // 8) * 8)    # multiple of 8 satisfies the (8,128) rule


def positional_encoding_forward(x, pe, *, dropout_p=0.1, training=False, seed=0):
    """x: (S, B, D); pe: (max_len, D).  Returns (S, B, D) = dropout(x + pe[:S])."""
    S, B, D = x.shape
    pe_s = pe[:S].astype(x.dtype)            # tiny glue slice (S*D elements)
    itemsize = jnp.dtype(x.dtype).itemsize
    tile_s = _pick_tile_s(S, B * D * itemsize)
    grid = (pl.cdiv(S, tile_s),)

    if D % 128 == 0:
        # D already fills whole lane tiles: keep (S, B, D) blocks and broadcast
        # pe over batch inside the kernel (pe HBM traffic stays S*D).
        x_in, pe_in = x, pe_s
        x_block, pe_block = (tile_s, B, D), (tile_s, D)
        x_map_eval = lambda i: (i, 0, 0)
        pe_map_eval = lambda i: (i, 0)
        x_map_train = lambda i, _seed: (i, 0, 0)
        pe_map_train = lambda i, _seed: (i, 0)
        eval_kernel, train_kernel = _add_pe_3d_kernel, _add_pe_dropout_3d_kernel
    else:
        # Small / unaligned D (demo d_model=32): flatten to a lane-dense 2-D
        # view so the output's last dim is the full B*D extent (no vst.msk).
        x_in = x.reshape(S, B * D)
        pe_in = jnp.tile(pe_s, (1, B))       # (S, B*D), row = pe[s] repeated B times
        x_block = pe_block = (tile_s, B * D)
        x_map_eval = pe_map_eval = lambda i: (i, 0)
        x_map_train = pe_map_train = lambda i, _seed: (i, 0)
        eval_kernel, train_kernel = _add_pe_2d_kernel, _add_pe_dropout_2d_kernel

    out_shape = jax.ShapeDtypeStruct(x_in.shape, x.dtype)
    cparams = pltpu.CompilerParams(dimension_semantics=("parallel",))

    if (not training) or dropout_p <= 0.0:
        out = pl.pallas_call(
            eval_kernel,
            out_shape=out_shape,
            grid_spec=pltpu.PrefetchScalarGridSpec(
                num_scalar_prefetch=0,
                grid=grid,
                in_specs=[pl.BlockSpec(x_block, x_map_eval),
                          pl.BlockSpec(pe_block, pe_map_eval)],
                out_specs=pl.BlockSpec(x_block, x_map_eval),
            ),
            compiler_params=cparams,
        )(x_in, pe_in)
    else:
        seed_arr = jnp.array([seed], dtype=jnp.int32)
        kernel = functools.partial(train_kernel, p=float(dropout_p))
        out = pl.pallas_call(
            kernel,
            out_shape=out_shape,
            grid_spec=pltpu.PrefetchScalarGridSpec(
                num_scalar_prefetch=1,
                grid=grid,
                in_specs=[pl.BlockSpec(x_block, x_map_train),
                          pl.BlockSpec(pe_block, pe_map_train)],
                out_specs=pl.BlockSpec(x_block, x_map_train),
            ),
            compiler_params=cparams,
        )(seed_arr, x_in, pe_in)

    return out.reshape(S, B, D)


if __name__ == "__main__":
    # Small shapes consistent with the module: seq=8, batch=2, d_model=32.
    S, B, D = 8, 2, 32
    MAX_LEN = 64
    p = 0.1

    key = jax.random.PRNGKey(0)
    x = jax.random.normal(key, (S, B, D), dtype=jnp.float32)
    pe = make_positional_encoding_table(D, max_len=MAX_LEN)
    ref = x + pe[:S][:, None, :]

    # Eval mode (dropout == identity) — matches PyTorch module.eval() exactly.
    out = jax.block_until_ready(
        positional_encoding_forward(x, pe, dropout_p=p, training=False))
    assert out.shape == (S, B, D)
    assert jnp.allclose(out, ref, atol=1e-6), "eval-mode mismatch vs reference"

    # Training mode (in-kernel inverted dropout, per-block RNG streams).
    out_t = jax.block_until_ready(
        positional_encoding_forward(x, pe, dropout_p=p, training=True, seed=1234))
    assert out_t.shape == (S, B, D)
    kept = jnp.abs(out_t) > 0
    assert bool(jnp.any(kept)) and bool(jnp.any(~kept)), "dropout mask degenerate"
    assert jnp.allclose(jnp.where(kept, out_t, ref / (1 - p)), ref / (1 - p),
                        atol=1e-5, rtol=1e-5), "dropout scaling mismatch"

    # Second config exercises the lane-aligned (D % 128 == 0) 3-D path.
    S2, B2, D2 = 16, 4, 128
    x2 = jax.random.normal(jax.random.PRNGKey(1), (S2, B2, D2), dtype=jnp.float32)
    pe2 = make_positional_encoding_table(D2, max_len=32)
    ref2 = x2 + pe2[:S2][:, None, :]
    out2 = jax.block_until_ready(
        positional_encoding_forward(x2, pe2, dropout_p=p, training=False))
    assert jnp.allclose(out2, ref2, atol=1e-6), "3-D path mismatch vs reference"
    out2_t = jax.block_until_ready(
        positional_encoding_forward(x2, pe2, dropout_p=p, training=True, seed=7))
    kept2 = jnp.abs(out2_t) > 0
    assert bool(jnp.any(kept2)) and bool(jnp.any(~kept2)), "3-D dropout degenerate"
    assert jnp.allclose(jnp.where(kept2, out2_t, ref2 / (1 - p)), ref2 / (1 - p),
                        atol=1e-5, rtol=1e-5), "3-D dropout scaling mismatch"

    print("KERNEL_OK")
</pallas_src>

<mosaic_0001>
module attributes {stable_mosaic.version = 11 : i64} {
  func.func @_add_pe_2d_kernel(%arg0: i32, %arg1: memref<8x64xf32, #tpu.memory_space<vmem>>, %arg2: memref<8x64xf32, #tpu.memory_space<vmem>>, %arg3: memref<8x64xf32, #tpu.memory_space<vmem>>) attributes {dimension_semantics = [#tpu.dimension_semantics<parallel>], iteration_bounds = array<i64: 1>, scalar_prefetch = 0 : i64, scratch_operands = 0 : i64, tpu.core_type = #tpu.core_type<tc>, window_params = [{transform_indices = @transform_0, window_bounds = array<i64: 8, 64>}, {transform_indices = @transform_1, window_bounds = array<i64: 8, 64>}, {transform_indices = @transform_2, window_bounds = array<i64: 8, 64>}]} {
    %c0 = arith.constant 0 : index
    %c0_0 = arith.constant 0 : index
    %0 = vector.load %arg1[%c0, %c0_0] : memref<8x64xf32, #tpu.memory_space<vmem>>, vector<8x64xf32>
    %c0_1 = arith.constant 0 : index
    %c0_2 = arith.constant 0 : index
    %1 = vector.load %arg2[%c0_1, %c0_2] : memref<8x64xf32, #tpu.memory_space<vmem>>, vector<8x64xf32>
    %2 = arith.addf %0, %1 : vector<8x64xf32>
    %c0_3 = arith.constant 0 : index
    %c0_4 = arith.constant 0 : index
    %3 = vector.load %arg3[%c0_3, %c0_4] : memref<8x64xf32, #tpu.memory_space<vmem>>, vector<8x64xf32>
    tpu.vector_store %arg3[%c0_3, %c0_4], %2 {strides = array<i32>} : memref<8x64xf32, #tpu.memory_space<vmem>>, vector<8x64xf32>,
    return
  }
  func.func @transform_0(%arg0: i32) -> (i32, i32) {
    %c0_i32 = arith.constant 0 : i32
    %c0_i32_0 = arith.constant 0 : i32
    return %arg0, %c0_i32 : i32, i32
  }
  func.func @transform_1(%arg0: i32) -> (i32, i32) {
    %c0_i32 = arith.constant 0 : i32
    %c0_i32_0 = arith.constant 0 : i32
    return %arg0, %c0_i32 : i32, i32
  }
  func.func @transform_2(%arg0: i32) -> (i32, i32) {
    %c0_i32 = arith.constant 0 : i32
    %c0_i32_0 = arith.constant 0 : i32
    return %arg0, %c0_i32 : i32, i32
  }
}

</mosaic_0001>

<llo_original>
// kernel: tpu_custom_call.1
$region0: #{tpu_custom_call.1}
  #allocation0 [shape = 'u32[]', space=smem, size = 0x4, offset = 0x4, fixed_abs, tag = 'smem constant byte address 0x4 - core index']
  #allocation1 [shape = 'u32[144,128]{1,0:T(1,128)}', space=vmem, size = 0x12000, scoped, tag = 'internal scratch']
  %s0 = inlined_call_operand.hbm [shape: f32[8,64], index: 0, kind: input, shape index: {}]
  %s1 = inlined_call_operand.hbm [shape: f32[8,64], index: 1, kind: input, shape index: {}]
  %s2 = inlined_call_operand.hbm [shape: f32[8,64], index: 2, kind: output, shape index: {}]
  %s3 = sld [smem:[#allocation0]]
  $region26: #{tpu_custom_call.1} parent=0
    _
  %s5 = ssub.s32 1, %s3
  %s6 = scalar_select 0, %s5, %s3
  $region1: #{tpu_custom_call.1} parent=0
    #allocation2 [shape = 'u8[4096]{0}', space=vmem, size = 0x1000, scoped, tag = 'input window, operand 0, single buffered']
    #allocation3 [shape = 's32[1]{0}', space=sflag, size = 0x4, scoped, tag = 'scoped memory for tpu_custom_call.1']
    #allocation4 [shape = 's32[1]{0}', space=sflag, size = 0x4, scoped, tag = 'scoped memory for tpu_custom_call.1']
    #allocation5 [shape = 'u8[4096]{0}', space=vmem, size = 0x1000, scoped, tag = 'input window, operand 1, single buffered']
    #allocation6 [shape = 's32[1]{0}', space=sflag, size = 0x4, scoped, tag = 'scoped memory for tpu_custom_call.1']
    #allocation7 [shape = 'u8[4096]{0}', space=vmem, size = 0x1000, scoped, tag = 'output window, operand 0, single buffered']
    %7 = vsyncpa [#allocation3], 0
    %8 = vsyncpa [#allocation6], 0
    %9 = vsyncpa [#allocation4], 0
    // Predicated region
    $region2: #{tpu_custom_call.1} parent=1 // pred_check
      _
    $region3: #{tpu_custom_call.1} parent=1 // pred_check_branch
      %11 = sbr.rel (0) target = $region5
    $region4: #{tpu_custom_call.1} parent=1 // pred_region
      %s13 = ssub.s32 128, 128
      %14 = vsyncadd [#allocation3], %s13
      %s16 = sshll.u32 [#allocation2], 4
      %s17 = int_to_ptr.vmem [resolvable:$true] %s16
      %19 = dma.hbm_to_vmem [thread:$0]  %s0, 128, %s17, [#allocation3]
    $region5: #{tpu_custom_call.1} parent=1 // pred_fallthru
      _
    // Predicated region
    $region6: #{tpu_custom_call.1} parent=1 // pred_check
      _
    $region7: #{tpu_custom_call.1} parent=1 // pred_check_branch
      %21 = sbr.rel (0) target = $region9
    $region8: #{tpu_custom_call.1} parent=1 // pred_region
      %s23 = ssub.s32 128, 128
      %24 = vsyncadd [#allocation6], %s23
      %s26 = sshll.u32 [#allocation5], 4
      %s27 = int_to_ptr.vmem [resolvable:$true] %s26
      %29 = dma.hbm_to_vmem [thread:$0]  %s1, 128, %s27, [#allocation6]
    $region9: #{tpu_custom_call.1} parent=1 // pred_fallthru
      _
    // Predicated region
    $region10: #{tpu_custom_call.1} parent=1 // pred_check
      _
    $region11: #{tpu_custom_call.1} parent=1 // pred_check_branch
      %31 = sbr.rel (0) target = $region13
    $region12: #{tpu_custom_call.1} parent=1 // pred_region
      %32 = dma.done [#allocation3], 128
    $region13: #{tpu_custom_call.1} parent=1 // pred_fallthru
      _
    // Predicated region
    $region14: #{tpu_custom_call.1} parent=1 // pred_check
      _
    $region15: #{tpu_custom_call.1} parent=1 // pred_check_branch
      %34 = sbr.rel (0) target = $region17
    $region16: #{tpu_custom_call.1} parent=1 // pred_region
      %35 = dma.done [#allocation6], 128
    $region17: #{tpu_custom_call.1} parent=1 // pred_fallthru
      _
    %v36 = vld [vmem:[#allocation2] sm:$0xff]
    %v37 = vld [vmem:[#allocation5] sm:$0xff]
    %v38 = vadd.f32 %v36, %v37
    %vm39 = vcmask 523264
    %40 = vst.msk [vmem:[#allocation7] sm:$0xff] %vm39, %v38
    // Predicated region
    $region18: #{tpu_custom_call.1} parent=1 // pred_check
      _
    $region19: #{tpu_custom_call.1} parent=1 // pred_check_branch
      %42 = sbr.rel (0) target = $region21
    $region20: #{tpu_custom_call.1} parent=1 // pred_region
      %s44 = ssub.s32 128, 128
      %45 = vsyncadd [#allocation4], %s44
      %s47 = sshll.u32 [#allocation7], 4
      %s48 = int_to_ptr.vmem [resolvable:$true] %s47
      %50 = dma.vmem_to_hbm [thread:$0]  %s48, 128, %s2, [#allocation4]
    $region21: #{tpu_custom_call.1} parent=1 // pred_fallthru
      _
    // Predicated region
    $region22: #{tpu_custom_call.1} parent=1 // pred_check
      _
    $region23: #{tpu_custom_call.1} parent=1 // pred_check_branch
      %52 = sbr.rel (0) target = $region25
    $region24: #{tpu_custom_call.1} parent=1 // pred_region
      %53 = dma.done [#allocation4], 128
    $region25: #{tpu_custom_call.1} parent=1 // pred_fallthru
      _
    %54 = vsyncpa [#allocation3], 1
    %55 = vsyncpa [#allocation6], 1
    %56 = vsyncpa [#allocation4], 1

</llo_original>
